<compile_context>
chip_gen: v7x
topology: tpu7x:2x2x1
jax: 0.10.0
libtpu: 0.0.40
codegen_flags: <defaults>
</compile_context>

<pallas_src>
import jax
import jax.numpy as jnp
from jax.experimental import pallas as pl
from jax.experimental.pallas import tpu as pltpu


# --------------------------- small helpers ----------------------------------

def _round_up(x, m):
    return ((x + m - 1) // m) * m


def _pick_tile(dim, candidates):
    for c in candidates:
        if dim % c == 0:
            return c
    return None


def _vmem_capacity_bytes():
    """Physical VMEM of this chip generation (conservative fallback = v7x)."""
    try:
        return int(pltpu.get_tpu_info().vmem_capacity_bytes)
    except Exception:
        return 64 * 1024 * 1024


def _enc_vmem_bytes(tm, tk, hidden_p, latent_p):
    """Rough VMEM footprint of call 1 (2x = double-buffered pipelining)."""
    b = 2 * tm * tk * 2                                           # x (bf16)
    b += 2 * tm * latent_p * 4                                    # eps
    b += 2 * tk * hidden_p * 2                                    # wq0 tile
    b += 2 * (2 * hidden_p * latent_p + latent_p * hidden_p) * 2  # wmu,wlv,wp0
    b += 2 * (2 * hidden_p + 2 * latent_p) * 4                    # biases
    b += 2 * (2 * tm * latent_p * 4 + tm * hidden_p * 2)          # mu,logvar,hdec
    b += tm * hidden_p * 4 + tm * 128 * 4                         # scratch
    return b


def _dec_vmem_bytes(tm, tn, hidden_p):
    return (2 * tm * hidden_p * 2 + 2 * hidden_p * tn * 2
            + 2 * tn * 4 + 2 * tm * tn * 2)


# --------------------------- kernels ----------------------------------------

def _encoder_kernel(x_ref, eps_ref, wq0_ref, bq0_ref,
                    wmu_ref, bmu_ref, wlv_ref, blv_ref,
                    wp0_ref, bp0_ref,
                    mu_ref, logvar_ref, hdec_ref,
                    acc_ref, ssq_ref):
    k = pl.program_id(1)

    @pl.when(k == 0)
    def _():
        acc_ref[...] = jnp.zeros_like(acc_ref)
        ssq_ref[...] = jnp.zeros_like(ssq_ref)

    x = x_ref[...]                          # bf16 tile (tm, tk)
    # Lane-partial sum of squares: VALU-only adds inside the K loop.  The
    # single cross-lane (XLU) reduce is deferred to the finalize step.
    xf = x.astype(jnp.float32)
    x2 = xf * xf
    tk = x.shape[1]
    part = ssq_ref[...]
    for c in range(tk // 128):              # static, lane-aligned slices
        part = part + x2[:, c * 128:(c + 1) * 128]
    ssq_ref[...] = part

    # Running x @ wq0 (bf16 operands, f32 accumulation on the MXU).
    acc_ref[...] += jnp.dot(x, wq0_ref[...], preferred_element_type=jnp.float32)

    @pl.when(k == pl.num_programs(1) - 1)
    def _():
        # F.normalize: x / max(||x||_2, 1e-12); per-row scalar commutes with
        # the matmul, so scale the accumulated product (rsqrt on the EUP).
        ssq = jnp.sum(ssq_ref[...], axis=1, keepdims=True)
        inv_norm = jax.lax.rsqrt(jnp.maximum(ssq, 1e-24))
        h = jnp.tanh(acc_ref[...] * inv_norm + bq0_ref[...])
        hb = h.astype(jnp.bfloat16)
        # Lane-dense split: two matmuls straight into mu / logvar.
        mu = (jnp.dot(hb, wmu_ref[...], preferred_element_type=jnp.float32)
              + bmu_ref[...])
        logvar = (jnp.dot(hb, wlv_ref[...], preferred_element_type=jnp.float32)
                  + blv_ref[...])
        # Reparameterize (training path).
        z = eps_ref[...] * jnp.exp(0.5 * logvar) + mu
        # Decoder first layer, emitted in bf16 for the second pallas_call.
        hdec = jnp.tanh(
            jnp.dot(z.astype(jnp.bfloat16), wp0_ref[...],
                    preferred_element_type=jnp.float32) + bp0_ref[...])
        mu_ref[...] = mu.astype(mu_ref.dtype)
        logvar_ref[...] = logvar.astype(logvar_ref.dtype)
        hdec_ref[...] = hdec.astype(hdec_ref.dtype)


def _decoder_kernel(h_ref, wp1_ref, bp1_ref, recon_ref):
    recon_ref[...] = (
        jnp.dot(h_ref[...], wp1_ref[...], preferred_element_type=jnp.float32)
        + bp1_ref[...]).astype(recon_ref.dtype)


# --------------------------- wrapper -----------------------------------------

def multi_vae_forward(x, eps, kparams, *, tm=None, tk=None, tn=None):
    """MultiVAE forward.  `kparams` comes from prepare_kernel_params (padded
    bf16 weights, f32 biases, wq1/bq1 pre-split into mu/logvar halves).
    Returns (recon_x [bf16], mu [f32], logvar [f32]) at the original shapes."""
    batch, n_items = x.shape
    latent = kparams["latent"]
    n_items_p, hidden_p = kparams["wq0"].shape
    latent_p = kparams["wmu"].shape[1]
    assert kparams["wp0"].shape == (latent_p, hidden_p)
    assert kparams["wp1"].shape == (hidden_p, n_items_p)
    assert eps.shape == (batch, latent)
    assert n_items <= n_items_p

    f32, bf16 = jnp.float32, jnp.bfloat16

    # ---- per-generation VMEM budget ----------------------------------------
    vmem_cap = _vmem_capacity_bytes()
    small_vmem = vmem_cap < 100 * 1024 * 1024       # v7x-like: 64 MiB, 2 TCs
    vmem_limit = int(min(max(vmem_cap - 12 * 1024 * 1024, 32 * 1024 * 1024),
                         112 * 1024 * 1024))
    budget = int(0.85 * vmem_limit)

    batch_p = _round_up(batch, 8)

    # ---- tile sizes ----------------------------------------------------------
    if tk is None:
        tk = _pick_tile(n_items_p, (4096, 2048, 1024, 512, 256, 128))
    if tn is None:
        tn = _pick_tile(n_items_p, (4096, 2048, 1024, 512, 256, 128))
    assert tk is not None and tn is not None, "n_items must be padded to a 128-multiple"
    assert n_items_p % tk == 0 and n_items_p % tn == 0 and tk % 128 == 0

    if tm is None:
        # Stream wq0 from HBM as few times as possible: 1 i-tile on single-TC
        # chips (v5e/v6e), >=2 on v7x so both TensorCores stay busy.
        min_i_tiles = 2 if small_vmem else 1
        tm_target = max(8, ((batch_p // min_i_tiles) // 8) * 8)
        cand = min(tm_target, batch_p)
        tm = 8
        while cand >= 8:
            if (batch_p % cand == 0
                    and _enc_vmem_bytes(cand, tk, hidden_p, latent_p) <= budget
                    and _dec_vmem_bytes(cand, tn, hidden_p) <= budget):
                tm = cand
                break
            cand -= 8
    assert batch_p % tm == 0

    # ---- pad + cast inputs once in the wrapper ------------------------------
    xp = x.astype(bf16)
    if n_items_p != n_items or batch_p != batch:
        xp = jnp.pad(xp, ((0, batch_p - batch), (0, n_items_p - n_items)))
    epsp = eps.astype(f32)
    if latent_p != latent or batch_p != batch:
        epsp = jnp.pad(epsp, ((0, batch_p - batch), (0, latent_p - latent)))

    i_tiles = batch_p // tm
    k_tiles = n_items_p // tk

    # ---- call 1: encoder + reparameterize + decoder hidden layer ------------
    enc_cost = pl.CostEstimate(
        flops=(2 * batch_p * n_items_p * hidden_p
               + 2 * batch_p * hidden_p * 2 * latent_p
               + 2 * batch_p * latent_p * hidden_p
               + 2 * batch_p * n_items_p),
        transcendentals=batch_p * (2 * hidden_p + latent_p + 1),
        bytes_accessed=(xp.size * 2                                 # x (bf16)
                        + i_tiles * kparams["wq0"].size * 2         # wq0 restream
                        + i_tiles * k_tiles * (3 * hidden_p * latent_p * 2)
                        + batch_p * latent_p * (4 + 2 * 4)          # eps + mu/logvar
                        + batch_p * hidden_p * 2),                  # hdec writeback
    )
    mu, logvar, h_dec = pl.pallas_call(
        _encoder_kernel,
        out_shape=(
            jax.ShapeDtypeStruct((batch_p, latent_p), f32),    # mu
            jax.ShapeDtypeStruct((batch_p, latent_p), f32),    # logvar
            jax.ShapeDtypeStruct((batch_p, hidden_p), bf16),   # decoder hidden
        ),
        grid_spec=pltpu.PrefetchScalarGridSpec(
            num_scalar_prefetch=0,
            grid=(i_tiles, k_tiles),
            in_specs=[
                pl.BlockSpec((tm, tk), lambda i, k: (i, k)),            # x
                pl.BlockSpec((tm, latent_p), lambda i, k: (i, 0)),      # eps
                pl.BlockSpec((tk, hidden_p), lambda i, k: (k, 0)),      # wq0
                pl.BlockSpec((1, hidden_p), lambda i, k: (0, 0)),       # bq0
                pl.BlockSpec((hidden_p, latent_p), lambda i, k: (0, 0)),  # wmu
                pl.BlockSpec((1, latent_p), lambda i, k: (0, 0)),       # bmu
                pl.BlockSpec((hidden_p, latent_p), lambda i, k: (0, 0)),  # wlv
                pl.BlockSpec((1, latent_p), lambda i, k: (0, 0)),       # blv
                pl.BlockSpec((latent_p, hidden_p), lambda i, k: (0, 0)),  # wp0
                pl.BlockSpec((1, hidden_p), lambda i, k: (0, 0)),       # bp0
            ],
            out_specs=(
                pl.BlockSpec((tm, latent_p), lambda i, k: (i, 0)),
                pl.BlockSpec((tm, latent_p), lambda i, k: (i, 0)),
                pl.BlockSpec((tm, hidden_p), lambda i, k: (i, 0)),
            ),
            scratch_shapes=[
                pltpu.VMEM((tm, hidden_p), f32),   # x @ wq0 accumulator
                pltpu.VMEM((tm, 128), f32),        # lane-partial sum of squares
            ],
        ),
        compiler_params=pltpu.CompilerParams(
            dimension_semantics=("parallel", "arbitrary"),
            vmem_limit_bytes=vmem_limit,
        ),
        cost_estimate=enc_cost,
    )(xp, epsp,
      kparams["wq0"], kparams["bq0"],
      kparams["wmu"], kparams["bmu"],
      kparams["wlv"], kparams["blv"],
      kparams["wp0"], kparams["bp0"])

    # ---- call 2: decoder output layer, N-tiled over n_items -----------------
    dec_cost = pl.CostEstimate(
        flops=2 * batch_p * hidden_p * n_items_p,
        transcendentals=0,
        bytes_accessed=(kparams["wp1"].size * 2
                        + batch_p * n_items_p * 2                    # recon bf16
                        + (n_items_p // tn) * batch_p * hidden_p * 2),
    )
    recon = pl.pallas_call(
        _decoder_kernel,
        out_shape=jax.ShapeDtypeStruct((batch_p, n_items_p), bf16),
        grid_spec=pltpu.PrefetchScalarGridSpec(
            num_scalar_prefetch=0,
            grid=(n_items_p // tn, batch_p // tm),   # batch innermost: each
            in_specs=[                               # wp1 tile is DMA'd once.
                pl.BlockSpec((tm, hidden_p), lambda j, i: (i, 0)),   # h_dec
                pl.BlockSpec((hidden_p, tn), lambda j, i: (0, j)),   # wp1
                pl.BlockSpec((1, tn), lambda j, i: (0, j)),          # bp1
            ],
            out_specs=pl.BlockSpec((tm, tn), lambda j, i: (i, j)),
        ),
        compiler_params=pltpu.CompilerParams(
            dimension_semantics=("parallel", "parallel"),
            vmem_limit_bytes=vmem_limit,
        ),
        cost_estimate=dec_cost,
    )(h_dec, kparams["wp1"], kparams["bp1"])

    # slice padding off
    return (recon[:batch, :n_items],
            mu[:batch, :latent],
            logvar[:batch, :latent])


# --------------------------- params / reference ------------------------------

def _xavier_normal(key, fan_in, fan_out):
    std = (2.0 / (fan_in + fan_out)) ** 0.5
    # weight already transposed to (in, out)
    return std * jax.random.normal(key, (fan_in, fan_out), jnp.float32)


def init_multi_vae_params(key, p_dims):
    """f32 master params; p_dims e.g. [latent, hidden, n_items]; q = reversed."""
    q_dims = p_dims[::-1]
    temp_q_dims = q_dims[:-1] + [q_dims[-1] * 2]
    keys = jax.random.split(key, 8)
    params = {}
    (qi0, qo0), (qi1, qo1) = zip(temp_q_dims[:-1], temp_q_dims[1:])
    params["wq0"] = _xavier_normal(keys[0], qi0, qo0)
    params["bq0"] = 0.001 * jax.random.normal(keys[1], (1, qo0), jnp.float32)
    params["wq1"] = _xavier_normal(keys[2], qi1, qo1)
    params["bq1"] = 0.001 * jax.random.normal(keys[3], (1, qo1), jnp.float32)
    (pi0, po0), (pi1, po1) = zip(p_dims[:-1], p_dims[1:])
    params["wp0"] = _xavier_normal(keys[4], pi0, po0)
    params["bp0"] = 0.001 * jax.random.normal(keys[5], (1, po0), jnp.float32)
    params["wp1"] = _xavier_normal(keys[6], pi1, po1)
    params["bp1"] = 0.001 * jax.random.normal(keys[7], (1, po1), jnp.float32)
    return params


def _default_item_align(n_items):
    if n_items >= 8192:
        return 2048
    if n_items >= 2048:
        return 1024
    return 512


def prepare_kernel_params(params, latent, *, item_align=None, feat_align=128):
    """bf16 weights for the MXU, f32 biases; wq1/bq1 split into mu/logvar
    halves; all dims zero-padded to TPU-friendly multiples (no full-dim tile
    fallback in the kernel)."""
    bf16 = jnp.bfloat16
    n_items, hidden = params["wq0"].shape
    assert params["wp0"].shape[0] == latent
    if item_align is None:
        item_align = _default_item_align(n_items)
    n_items_p = _round_up(n_items, item_align)
    hidden_p = _round_up(hidden, feat_align)
    latent_p = _round_up(latent, feat_align)

    def pad2(w, rows, cols):
        return jnp.pad(w, ((0, rows - w.shape[0]), (0, cols - w.shape[1])))

    wq1, bq1 = params["wq1"], params["bq1"]
    return {
        "latent": latent,
        "n_items": n_items,
        "wq0": pad2(params["wq0"], n_items_p, hidden_p).astype(bf16),
        "bq0": pad2(params["bq0"], 1, hidden_p),
        "wmu": pad2(wq1[:, :latent], hidden_p, latent_p).astype(bf16),
        "bmu": pad2(bq1[:, :latent], 1, latent_p),
        "wlv": pad2(wq1[:, latent:], hidden_p, latent_p).astype(bf16),
        "blv": pad2(bq1[:, latent:], 1, latent_p),
        "wp0": pad2(params["wp0"], latent_p, hidden_p).astype(bf16),
        "bp0": pad2(params["bp0"], 1, hidden_p),
        "wp1": pad2(params["wp1"], hidden_p, n_items_p).astype(bf16),
        "bp1": pad2(params["bp1"], 1, n_items_p),
    }


def _reference_forward(x, eps, params):
    # pure-JAX f32 reference (matches the PyTorch module in training mode).
    norm = jnp.sqrt(jnp.sum(x * x, axis=1, keepdims=True))
    h = x / jnp.maximum(norm, 1e-12)
    h = jnp.tanh(h @ params["wq0"] + params["bq0"])
    h = h @ params["wq1"] + params["bq1"]
    latent = params["wp0"].shape[0]
    mu, logvar = h[:, :latent], h[:, latent:]
    z = eps * jnp.exp(0.5 * logvar) + mu
    h = jnp.tanh(z @ params["wp0"] + params["bp0"])
    recon = h @ params["wp1"] + params["bp1"]
    return recon, mu, logvar


if __name__ == "__main__":
    key = jax.random.PRNGKey(0)
    k_param, k_x, k_eps = jax.random.split(key, 3)

    # Small, deliberately non-aligned shapes so the padding paths are exercised
    # (latent->128, hidden->128, n_items->1024, batch->8).
    latent, hidden, n_items = 20, 72, 600
    p_dims = [latent, hidden, n_items]
    batch = 6

    params = init_multi_vae_params(k_param, p_dims)
    kparams = prepare_kernel_params(params, latent)

    # x: implicit user-item interaction counts (non-negative)
    x = jax.random.uniform(k_x, (batch, n_items), jnp.float32)
    eps = jax.random.normal(k_eps, (batch, latent), jnp.float32)

    ref_recon, ref_mu, ref_logvar = _reference_forward(x, eps, params)

    def check(recon_x, mu, logvar):
        # bf16 matmul operands / bf16 recon => loosened tolerance vs f32 ref.
        assert jnp.allclose(mu, ref_mu, atol=3e-2, rtol=3e-2)
        assert jnp.allclose(logvar, ref_logvar, atol=3e-2, rtol=3e-2)
        assert jnp.allclose(recon_x.astype(jnp.float32), ref_recon,
                            atol=5e-2, rtol=5e-2)

    # (1) small explicit tiles: exercises the K-accumulator grid (8 k-steps)
    # and the N-tiled decoder grid (8 n-tiles).
    out = multi_vae_forward(x, eps, kparams, tm=8, tk=128, tn=128)
    jax.block_until_ready(out)
    check(*out)

    # (2) auto tiling: exercises the hardware-aware (VMEM-bounded) tile picker.
    out = multi_vae_forward(x, eps, kparams)
    jax.block_until_ready(out)
    check(*out)

    print("KERNEL_OK")
</pallas_src>

<mosaic_0001>
module attributes {stable_mosaic.version = 11 : i64} {
  func.func @_encoder_kernel(%arg0: i32, %arg1: i32, %arg2: memref<8x128xbf16, #tpu.memory_space<vmem>>, %arg3: memref<8x128xf32, #tpu.memory_space<vmem>>, %arg4: memref<128x128xbf16, #tpu.memory_space<vmem>>, %arg5: memref<1x128xf32, #tpu.memory_space<vmem>>, %arg6: memref<128x128xbf16, #tpu.memory_space<vmem>>, %arg7: memref<1x128xf32, #tpu.memory_space<vmem>>, %arg8: memref<128x128xbf16, #tpu.memory_space<vmem>>, %arg9: memref<1x128xf32, #tpu.memory_space<vmem>>, %arg10: memref<128x128xbf16, #tpu.memory_space<vmem>>, %arg11: memref<1x128xf32, #tpu.memory_space<vmem>>, %arg12: memref<8x128xf32, #tpu.memory_space<vmem>>, %arg13: memref<8x128xf32, #tpu.memory_space<vmem>>, %arg14: memref<8x128xbf16, #tpu.memory_space<vmem>>, %arg15: memref<8x128xf32, #tpu.memory_space<vmem>>, %arg16: memref<8x128xf32, #tpu.memory_space<vmem>>) attributes {dimension_semantics = [#tpu.dimension_semantics<parallel>, #tpu.dimension_semantics<arbitrary>], iteration_bounds = array<i64: 1, 8>, scalar_prefetch = 0 : i64, scratch_operands = 2 : i64, tpu.core_type = #tpu.core_type<tc>, window_params = [{transform_indices = @transform_0, window_bounds = array<i64: 8, 128>}, {transform_indices = @transform_1, window_bounds = array<i64: 8, 128>}, {transform_indices = @transform_2, window_bounds = array<i64: 128, 128>}, {pipeline_mode = #tpu.pipeline_mode<synchronous>, transform_indices = @transform_3, window_bounds = array<i64: 1, 128>}, {pipeline_mode = #tpu.pipeline_mode<synchronous>, transform_indices = @transform_4, window_bounds = array<i64: 128, 128>}, {pipeline_mode = #tpu.pipeline_mode<synchronous>, transform_indices = @transform_5, window_bounds = array<i64: 1, 128>}, {pipeline_mode = #tpu.pipeline_mode<synchronous>, transform_indices = @transform_6, window_bounds = array<i64: 128, 128>}, {pipeline_mode = #tpu.pipeline_mode<synchronous>, transform_indices = @transform_7, window_bounds = array<i64: 1, 128>}, {pipeline_mode = #tpu.pipeline_mode<synchronous>, transform_indices = @transform_8, window_bounds = array<i64: 128, 128>}, {pipeline_mode = #tpu.pipeline_mode<synchronous>, transform_indices = @transform_9, window_bounds = array<i64: 1, 128>}, {transform_indices = @transform_10, window_bounds = array<i64: 8, 128>}, {transform_indices = @transform_11, window_bounds = array<i64: 8, 128>}, {transform_indices = @transform_12, window_bounds = array<i64: 8, 128>}]} {
    %c0_i32 = arith.constant 0 : i32
    %0 = arith.cmpi eq, %arg1, %c0_i32 : i32
    %1 = arith.extui %0 : i1 to i32
    %c0_i32_0 = arith.constant 0 : i32
    %2 = arith.cmpi ne, %1, %c0_i32_0 : i32
    scf.if %2 {
      %cst_13 = arith.constant 0.000000e+00 : f32
      %17 = vector.broadcast %cst_13 : f32 to vector<8x128xf32>
      %c0_14 = arith.constant 0 : index
      %c0_15 = arith.constant 0 : index
      %18 = vector.load %arg15[%c0_14, %c0_15] : memref<8x128xf32, #tpu.memory_space<vmem>>, vector<8x128xf32>
      tpu.vector_store %arg15[%c0_14, %c0_15], %17 {strides = array<i32>} : memref<8x128xf32, #tpu.memory_space<vmem>>, vector<8x128xf32>,
      %cst_16 = arith.constant 0.000000e+00 : f32
      %19 = vector.broadcast %cst_16 : f32 to vector<8x128xf32>
      %c0_17 = arith.constant 0 : index
      %c0_18 = arith.constant 0 : index
      %20 = vector.load %arg16[%c0_17, %c0_18] : memref<8x128xf32, #tpu.memory_space<vmem>>, vector<8x128xf32>
      tpu.vector_store %arg16[%c0_17, %c0_18], %19 {strides = array<i32>} : memref<8x128xf32, #tpu.memory_space<vmem>>, vector<8x128xf32>,
    } else {
    }
    %c0 = arith.constant 0 : index
    %c0_1 = arith.constant 0 : index
    %3 = vector.load %arg2[%c0, %c0_1] : memref<8x128xbf16, #tpu.memory_space<vmem>>, vector<8x128xbf16>
    %4 = arith.extf %3 : vector<8x128xbf16> to vector<8x128xf32>
    %5 = arith.mulf %4, %4 : vector<8x128xf32>
    %c0_2 = arith.constant 0 : index
    %c0_3 = arith.constant 0 : index
    %6 = vector.load %arg16[%c0_2, %c0_3] : memref<8x128xf32, #tpu.memory_space<vmem>>, vector<8x128xf32>
    %7 = arith.addf %6, %5 : vector<8x128xf32>
    %c0_4 = arith.constant 0 : index
    %c0_5 = arith.constant 0 : index
    %8 = vector.load %arg16[%c0_4, %c0_5] : memref<8x128xf32, #tpu.memory_space<vmem>>, vector<8x128xf32>
    tpu.vector_store %arg16[%c0_4, %c0_5], %7 {strides = array<i32>} : memref<8x128xf32, #tpu.memory_space<vmem>>, vector<8x128xf32>,
    %c0_6 = arith.constant 0 : index
    %c0_7 = arith.constant 0 : index
    %9 = vector.load %arg15[%c0_6, %c0_7] : memref<8x128xf32, #tpu.memory_space<vmem>>, vector<8x128xf32>
    %c0_8 = arith.constant 0 : index
    %c0_9 = arith.constant 0 : index
    %10 = vector.load %arg4[%c0_8, %c0_9] : memref<128x128xbf16, #tpu.memory_space<vmem>>, vector<128x128xbf16>
    %cst = arith.constant dense<0.000000e+00> : vector<8x128xf32>
    %11 = tpu.matmul %3, %10, %cst {dimension_numbers = #tpu.dot_dimension_numbers<[1], [0], [0], [1], [0, 0, 1, 1], [], []>} : vector<8x128xbf16>, vector<128x128xbf16>, vector<8x128xf32> -> vector<8x128xf32>
    %12 = arith.addf %9, %11 : vector<8x128xf32>
    %c0_10 = arith.constant 0 : index
    %c0_11 = arith.constant 0 : index
    %13 = vector.load %arg15[%c0_10, %c0_11] : memref<8x128xf32, #tpu.memory_space<vmem>>, vector<8x128xf32>
    tpu.vector_store %arg15[%c0_10, %c0_11], %12 {strides = array<i32>} : memref<8x128xf32, #tpu.memory_space<vmem>>, vector<8x128xf32>,
    %c7_i32 = arith.constant 7 : i32
    %14 = arith.cmpi eq, %arg1, %c7_i32 : i32
    %15 = arith.extui %14 : i1 to i32
    %c0_i32_12 = arith.constant 0 : i32
    %16 = arith.cmpi ne, %15, %c0_i32_12 : i32
    scf.if %16 {
      %c0_13 = arith.constant 0 : index
      %c0_14 = arith.constant 0 : index
      %17 = vector.load %arg16[%c0_13, %c0_14] : memref<8x128xf32, #tpu.memory_space<vmem>>, vector<8x128xf32>
      %cst_15 = arith.constant dense<0.000000e+00> : vector<8xf32>
      %18 = vector.multi_reduction <add>, %17, %cst_15 [1] : vector<8x128xf32> to vector<8xf32>
      %19 = vector.shape_cast %18 : vector<8xf32> to vector<8x1xf32>
      %cst_16 = arith.constant 1.000000e-24 : f32
      %20 = vector.broadcast %cst_16 : f32 to vector<8x1xf32>
      %21 = arith.maximumf %19, %20 : vector<8x1xf32>
      %22 = math.rsqrt %21 : vector<8x1xf32>
      %c0_17 = arith.constant 0 : index
      %c0_18 = arith.constant 0 : index
      %23 = vector.load %arg15[%c0_17, %c0_18] : memref<8x128xf32, #tpu.memory_space<vmem>>, vector<8x128xf32>
      %24 = vector.broadcast %22 : vector<8x1xf32> to vector<8x128xf32>
      %25 = arith.mulf %23, %24 : vector<8x128xf32>
      %c0_19 = arith.constant 0 : index
      %c0_20 = arith.constant 0 : index
      %26 = vector.load %arg5[%c0_19, %c0_20] : memref<1x128xf32, #tpu.memory_space<vmem>>, vector<1x128xf32>
      %27 = vector.broadcast %26 : vector<1x128xf32> to vector<8x128xf32>
      %28 = arith.addf %25, %27 : vector<8x128xf32>
      %29 = math.tanh %28 : vector<8x128xf32>
      %30 = arith.truncf %29 : vector<8x128xf32> to vector<8x128xbf16>
      %c0_21 = arith.constant 0 : index
      %c0_22 = arith.constant 0 : index
      %31 = vector.load %arg6[%c0_21, %c0_22] : memref<128x128xbf16, #tpu.memory_space<vmem>>, vector<128x128xbf16>
      %cst_23 = arith.constant dense<0.000000e+00> : vector<8x128xf32>
      %32 = tpu.matmul %30, %31, %cst_23 {dimension_numbers = #tpu.dot_dimension_numbers<[1], [0], [0], [1], [0, 0, 1, 1], [], []>} : vector<8x128xbf16>, vector<128x128xbf16>, vector<8x128xf32> -> vector<8x128xf32>
      %c0_24 = arith.constant 0 : index
      %c0_25 = arith.constant 0 : index
      %33 = vector.load %arg7[%c0_24, %c0_25] : memref<1x128xf32, #tpu.memory_space<vmem>>, vector<1x128xf32>
      %34 = vector.broadcast %33 : vector<1x128xf32> to vector<8x128xf32>
      %35 = arith.addf %32, %34 : vector<8x128xf32>
      %c0_26 = arith.constant 0 : index
      %c0_27 = arith.constant 0 : index
      %36 = vector.load %arg8[%c0_26, %c0_27] : memref<128x128xbf16, #tpu.memory_space<vmem>>, vector<128x128xbf16>
      %cst_28 = arith.constant dense<0.000000e+00> : vector<8x128xf32>
      %37 = tpu.matmul %30, %36, %cst_28 {dimension_numbers = #tpu.dot_dimension_numbers<[1], [0], [0], [1], [0, 0, 1, 1], [], []>} : vector<8x128xbf16>, vector<128x128xbf16>, vector<8x128xf32> -> vector<8x128xf32>
      %c0_29 = arith.constant 0 : index
      %c0_30 = arith.constant 0 : index
      %38 = vector.load %arg9[%c0_29, %c0_30] : memref<1x128xf32, #tpu.memory_space<vmem>>, vector<1x128xf32>
      %39 = vector.broadcast %38 : vector<1x128xf32> to vector<8x128xf32>
      %40 = arith.addf %37, %39 : vector<8x128xf32>
      %c0_31 = arith.constant 0 : index
      %c0_32 = arith.constant 0 : index
      %41 = vector.load %arg3[%c0_31, %c0_32] : memref<8x128xf32, #tpu.memory_space<vmem>>, vector<8x128xf32>
      %cst_33 = arith.constant 5.000000e-01 : f32
      %42 = vector.broadcast %cst_33 : f32 to vector<8x128xf32>
      %43 = arith.mulf %42, %40 : vector<8x128xf32>
      %44 = math.exp %43 : vector<8x128xf32>
      %45 = arith.mulf %41, %44 : vector<8x128xf32>
      %46 = arith.addf %45, %35 : vector<8x128xf32>
      %47 = arith.truncf %46 : vector<8x128xf32> to vector<8x128xbf16>
      %c0_34 = arith.constant 0 : index
      %c0_35 = arith.constant 0 : index
      %48 = vector.load %arg10[%c0_34, %c0_35] : memref<128x128xbf16, #tpu.memory_space<vmem>>, vector<128x128xbf16>
      %cst_36 = arith.constant dense<0.000000e+00> : vector<8x128xf32>
      %49 = tpu.matmul %47, %48, %cst_36 {dimension_numbers = #tpu.dot_dimension_numbers<[1], [0], [0], [1], [0, 0, 1, 1], [], []>} : vector<8x128xbf16>, vector<128x128xbf16>, vector<8x128xf32> -> vector<8x128xf32>
      %c0_37 = arith.constant 0 : index
      %c0_38 = arith.constant 0 : index
      %50 = vector.load %arg11[%c0_37, %c0_38] : memref<1x128xf32, #tpu.memory_space<vmem>>, vector<1x128xf32>
      %51 = vector.broadcast %50 : vector<1x128xf32> to vector<8x128xf32>
      %52 = arith.addf %49, %51 : vector<8x128xf32>
      %53 = math.tanh %52 : vector<8x128xf32>
      %c0_39 = arith.constant 0 : index
      %c0_40 = arith.constant 0 : index
      %54 = vector.load %arg12[%c0_39, %c0_40] : memref<8x128xf32, #tpu.memory_space<vmem>>, vector<8x128xf32>
      tpu.vector_store %arg12[%c0_39, %c0_40], %35 {strides = array<i32>} : memref<8x128xf32, #tpu.memory_space<vmem>>, vector<8x128xf32>,
      %c0_41 = arith.constant 0 : index
      %c0_42 = arith.constant 0 : index
      %55 = vector.load %arg13[%c0_41, %c0_42] : memref<8x128xf32, #tpu.memory_space<vmem>>, vector<8x128xf32>
      tpu.vector_store %arg13[%c0_41, %c0_42], %40 {strides = array<i32>} : memref<8x128xf32, #tpu.memory_space<vmem>>, vector<8x128xf32>,
      %56 = arith.truncf %53 : vector<8x128xf32> to vector<8x128xbf16>
      %c0_43 = arith.constant 0 : index
      %c0_44 = arith.constant 0 : index
      %57 = vector.load %arg14[%c0_43, %c0_44] : memref<8x128xbf16, #tpu.memory_space<vmem>>, vector<8x128xbf16>
      tpu.vector_store %arg14[%c0_43, %c0_44], %56 {strides = array<i32>} : memref<8x128xbf16, #tpu.memory_space<vmem>>, vector<8x128xbf16>,
    } else {
    }
    return
  }
  func.func @transform_0(%arg0: i32, %arg1: i32) -> (i32, i32) {
    %c0_i32 = arith.constant 0 : i32
    return %arg0, %arg1 : i32, i32
  }
  func.func @transform_1(%arg0: i32, %arg1: i32) -> (i32, i32) {
    %c0_i32 = arith.constant 0 : i32
    %c0_i32_0 = arith.constant 0 : i32
    return %arg0, %c0_i32 : i32, i32
  }
  func.func @transform_2(%arg0: i32, %arg1: i32) -> (i32, i32) {
    %c0_i32 = arith.constant 0 : i32
    %c0_i32_0 = arith.constant 0 : i32
    return %arg1, %c0_i32 : i32, i32
  }
  func.func @transform_3(%arg0: i32, %arg1: i32) -> (i32, i32) {
    %c0_i32 = arith.constant 0 : i32
    %c0_i32_0 = arith.constant 0 : i32
    %c0_i32_1 = arith.constant 0 : i32
    return %c0_i32, %c0_i32_0 : i32, i32
  }
  func.func @transform_4(%arg0: i32, %arg1: i32) -> (i32, i32) {
    %c0_i32 = arith.constant 0 : i32
    %c0_i32_0 = arith.constant 0 : i32
    %c0_i32_1 = arith.constant 0 : i32
    return %c0_i32, %c0_i32_0 : i32, i32
  }
  func.func @transform_5(%arg0: i32, %arg1: i32) -> (i32, i32) {
    %c0_i32 = arith.constant 0 : i32
    %c0_i32_0 = arith.constant 0 : i32
    %c0_i32_1 = arith.constant 0 : i32
    return %c0_i32, %c0_i32_0 : i32, i32
  }
  func.func @transform_6(%arg0: i32, %arg1: i32) -> (i32, i32) {
    %c0_i32 = arith.constant 0 : i32
    %c0_i32_0 = arith.constant 0 : i32
    %c0_i32_1 = arith.constant 0 : i32
    return %c0_i32, %c0_i32_0 : i32, i32
  }
  func.func @transform_7(%arg0: i32, %arg1: i32) -> (i32, i32) {
    %c0_i32 = arith.constant 0 : i32
    %c0_i32_0 = arith.constant 0 : i32
    %c0_i32_1 = arith.constant 0 : i32
    return %c0_i32, %c0_i32_0 : i32, i32
  }
  func.func @transform_8(%arg0: i32, %arg1: i32) -> (i32, i32) {
    %c0_i32 = arith.constant 0 : i32
    %c0_i32_0 = arith.constant 0 : i32
    %c0_i32_1 = arith.constant 0 : i32
    return %c0_i32, %c0_i32_0 : i32, i32
  }
  func.func @transform_9(%arg0: i32, %arg1: i32) -> (i32, i32) {
    %c0_i32 = arith.constant 0 : i32
    %c0_i32_0 = arith.constant 0 : i32
    %c0_i32_1 = arith.constant 0 : i32
    return %c0_i32, %c0_i32_0 : i32, i32
  }
  func.func @transform_10(%arg0: i32, %arg1: i32) -> (i32, i32) {
    %c0_i32 = arith.constant 0 : i32
    %c0_i32_0 = arith.constant 0 : i32
    return %arg0, %c0_i32 : i32, i32
  }
  func.func @transform_11(%arg0: i32, %arg1: i32) -> (i32, i32) {
    %c0_i32 = arith.constant 0 : i32
    %c0_i32_0 = arith.constant 0 : i32
    return %arg0, %c0_i32 : i32, i32
  }
  func.func @transform_12(%arg0: i32, %arg1: i32) -> (i32, i32) {
    %c0_i32 = arith.constant 0 : i32
    %c0_i32_0 = arith.constant 0 : i32
    return %arg0, %c0_i32 : i32, i32
  }
}

</mosaic_0001>

<llo_original>
// kernel: tpu_custom_call.1
$region0: #{tpu_custom_call.1}
  #allocation0 [shape = 'u32[]', space=smem, size = 0x4, offset = 0x4, fixed_abs, tag = 'smem constant byte address 0x4 - core index']
  #allocation1 [shape = 'u32[144,128]{1,0:T(1,128)}', space=vmem, size = 0x12000, scoped, tag = 'internal scratch']
  #allocation2 [shape = 'f32[8,128]{1,0:T(8,128)}', space=vmem, size = 0x1000, scoped, tag = 'scratch operand']
  #allocation3 [shape = 'f32[8,128]{1,0:T(8,128)}', space=vmem, size = 0x1000, scoped, tag = 'scratch operand']
  %s0 = inlined_call_operand.hbm [shape: bf16[8,1024], index: 0, kind: input, shape index: {}]
  %s1 = inlined_call_operand.hbm [shape: f32[8,128], index: 1, kind: input, shape index: {}]
  %s2 = inlined_call_operand.hbm [shape: bf16[1024,128], index: 2, kind: input, shape index: {}]
  %s3 = inlined_call_operand.vmem [shape: f32[1,128], index: 3, kind: input, shape index: {}]
  %s4 = inlined_call_operand.hbm [shape: bf16[128,128], index: 4, kind: input, shape index: {}]
  %s5 = inlined_call_operand.vmem [shape: f32[1,128], index: 5, kind: input, shape index: {}]
  %s6 = inlined_call_operand.hbm [shape: bf16[128,128], index: 6, kind: input, shape index: {}]
  %s7 = inlined_call_operand.vmem [shape: f32[1,128], index: 7, kind: input, shape index: {}]
  %s8 = inlined_call_operand.hbm [shape: bf16[128,128], index: 8, kind: input, shape index: {}]
  %s9 = inlined_call_operand.vmem [shape: f32[1,128], index: 9, kind: input, shape index: {}]
  %s10 = inlined_call_operand.hbm [shape: f32[8,128], index: 10, kind: output, shape index: {0}]
  %s11 = inlined_call_operand.hbm [shape: f32[8,128], index: 11, kind: output, shape index: {1}]
  %s12 = inlined_call_operand.hbm [shape: bf16[8,128], index: 12, kind: output, shape index: {2}]
  %13 = xla_tuple %s10, %s11, %s12
  %s14 = sld [smem:[#allocation0]]
  $region121: #{tpu_custom_call.1} parent=0
    _
  %s16 = ssub.s32 1, %s14
  %s17 = scalar_select 0, %s16, %s14
  $region1: #{tpu_custom_call.1} parent=0
    #allocation4 [shape = 'u8[4096]{0}', space=vmem, size = 0x1000, scoped, tag = 'input window, operand 0']
    #allocation5 [shape = 's32[2]{0}', space=sflag, size = 0x8, scoped, tag = 'scoped memory for tpu_custom_call.1']
    #allocation6 [shape = 's32[2]{0}', space=sflag, size = 0x8, scoped, tag = 'scoped memory for tpu_custom_call.1']
    #allocation7 [shape = 'u8[4096]{0}', space=vmem, size = 0x1000, scoped, tag = 'input window, operand 1, single buffered']
    #allocation8 [shape = 's32[1]{0}', space=sflag, size = 0x4, scoped, tag = 'scoped memory for tpu_custom_call.1']
    #allocation9 [shape = 'u8[65536]{0}', space=vmem, size = 0x10000, scoped, tag = 'input window, operand 2']
    #allocation10 [shape = 'u8[32768]{0}', space=vmem, size = 0x8000, scoped, tag = 'input window, operand 4, single buffered']
    #allocation11 [shape = 'u8[32768]{0}', space=vmem, size = 0x8000, scoped, tag = 'input window, operand 6, single buffered']
    #allocation12 [shape = 's32[1]{0}', space=sflag, size = 0x4, scoped, tag = 'scoped memory for tpu_custom_call.1']
    #allocation13 [shape = 'u8[32768]{0}', space=vmem, size = 0x8000, scoped, tag = 'input window, operand 8, single buffered']
    #allocation14 [shape = 'u8[4096]{0}', space=vmem, size = 0x1000, scoped, tag = 'output window, operand 0, single buffered']
    #allocation15 [shape = 'u8[4096]{0}', space=vmem, size = 0x1000, scoped, tag = 'output window, operand 1, single buffered']
    #allocation16 [shape = 's32[1]{0}', space=sflag, size = 0x4, scoped, tag = 'scoped memory for tpu_custom_call.1']
    #allocation17 [shape = 'u8[2048]{0}', space=vmem, size = 0x800, scoped, tag = 'output window, operand 2, single buffered']
    %18 = vsyncpa [#allocation5], 0
    %s19 = scalar_lea.sflag [#allocation5], 1
    %20 = vsyncpa %s19, 0
    %21 = vsyncpa [#allocation8], 0
    %22 = vsyncpa [#allocation12], 0
    %23 = vsyncpa [#allocation6], 0
    %24 = vsyncpa [#allocation16], 0
    loop: start=0, step=1, limit=10
    $region2: #{tpu_custom_call.1} parent=1 // loop_pre_header
      _
    $region3: #{tpu_custom_call.1} parent=1 // loop_header
      %s26 = sphi 0, %s30
      %p27 = scmp.ge.s32.totalorder %s26, 10
      %s33 = sphi 0, %s45
      %s34 = sphi 0, %s41
      %s35 = sphi 0, %s33
      %s36 = sphi 0, %s34
      %s37 = sphi 0, %s35
      %s38 = sphi 0, %s36
      %s50 = sphi 0, %s52
      %s53 = sphi 0, %s50
      %s54 = sphi 0, %s53
      %s70 = sphi 0, %s54
      %s76 = sphi 0, %s78
      %s79 = sphi 0, %s76
      %s80 = sphi 0, %s79
      %s96 = sphi 0, %s80
      %s102 = sphi 0, %s104
      %s105 = sphi 0, %s102
      %s106 = sphi 0, %s105
      %s122 = sphi 0, %s106
      %s126 = sphi 0, %s126
      %s128 = sphi 0, %s126
      %s129 = sphi 0, %s128
      %s143 = sphi 0, %s129
      %s147 = sphi 0, %s147
      %s149 = sphi 0, %s147
      %s150 = sphi 0, %s149
      %s164 = sphi 0, %s150
      %s168 = sphi 0, %s168
      %s170 = sphi 0, %s168
      %s171 = sphi 0, %s170
      %s185 = sphi 0, %s171
      %s189 = sphi 0, %s189
      %s191 = sphi 0, %s189
      %s192 = sphi 0, %s191
      %s206 = sphi 0, %s192
      %s210 = sphi 0, %s210
      %s212 = sphi 0, %s210
      %s213 = sphi 0, %s212
      %s227 = sphi 0, %s213
      %s231 = sphi 0, %s231
      %s233 = sphi 0, %s231
      %s234 = sphi 0, %s233
      %s248 = sphi 0, %s234
      %s252 = sphi 0, %s252
      %s254 = sphi 0, %s252
      %s255 = sphi 0, %s254
      %s269 = sphi 0, %s255
      %s275 = sphi 0, %s277
      %s278 = sphi 0, %s275
      %s279 = sphi 0, %s278
      %s295 = sphi 0, %s279
      %s301 = sphi 0, %s303
      %s304 = sphi 0, %s301
      %s305 = sphi 0, %s304
      %s321 = sphi 0, %s305
      %s327 = sphi 0, %s329
      %s330 = sphi 0, %s327
      %s331 = sphi 0, %s330
      %s347 = sphi 0, %s331
    $region4: #{tpu_custom_call.1} parent=1 // loop_header_branch
      %29 = sbr.rel (%p27) target = $region8
    $region5: #{tpu_custom_call.1} parent=1 // loop_body
      %s31 = ssub.s32 %s26, 1
      %s32 = ssub.s32 %s26, 2
      %s39 = sadd.s32 1, %s34
      %p40 = scmp.ge.s32.totalorder %s39, 8
      %s41 = scalar_select %p40, 0, %s39
      %s42 = sadd.s32 1, %s33
      %s43 = scalar_select %p40, %s42, %s33
      %p44 = scmp.ge.s32.totalorder %s43, 1
      %s45 = scalar_select %p44, 0, %s43
      %s46 = ssub.s32 %s33, %s45
      %s47 = ssub.s32 %s34, %s41
      %s48 = sor.u32 %s46, %s47
      %p49 = scmp.eq.s32.totalorder %s48, 0
      %s51 = sadd.s32 %s50, 1
      %s52 = scalar_select %p49, %s50, %s51
      %p55 = pneg %p49
      %p56 = scmp.eq.s32.totalorder %s26, 7
      %p57 = por %p55, %p56
      %p58 = scmp.ne.s32.totalorder %s50, %s53
      %p59 = scmp.eq.s32.totalorder %s26, 0
      %p60 = por %p58, %p59
      %p61 = scmp.ne.s32.totalorder %s50, %s53
      %p62 = scmp.eq.s32.totalorder %s31, 7
      %p63 = por %p61, %p62
      %p64 = scmp.ne.s32.totalorder %s53, %s54
      %p65 = scmp.eq.s32.totalorder %s31, 0
      %p66 = por %p64, %p65
      %p67 = scmp.ne.s32.totalorder %s53, %s54
      %p68 = scmp.eq.s32.totalorder %s32, 7
      %p69 = por %p67, %p68
      %p71 = scmp.ne.s32.totalorder %s54, %s70
      %p72 = scmp.eq.s32.totalorder %s32, 0
      %p73 = por %p71, %p72
      %s74 = ssub.s32 %s33, %s45
      %p75 = scmp.eq.s32.totalorder %s74, 0
      %s77 = sadd.s32 %s76, 1
      %s78 = scalar_select %p75, %s76, %s77
      %p81 = pneg %p75
      %p82 = scmp.eq.s32.totalorder %s26, 7
      %p83 = por %p81, %p82
      %p84 = scmp.ne.s32.totalorder %s76, %s79
      %p85 = scmp.eq.s32.totalorder %s26, 0
      %p86 = por %p84, %p85
      %p87 = scmp.ne.s32.totalorder %s76, %s79
      %p88 = scmp.eq.s32.totalorder %s31, 7
      %p89 = por %p87, %p88
      %p90 = scmp.ne.s32.totalorder %s79, %s80
      %p91 = scmp.eq.s32.totalorder %s31, 0
      %p92 = por %p90, %p91
      %p93 = scmp.ne.s32.totalorder %s79, %s80
      %p94 = scmp.eq.s32.totalorder %s32, 7
      %p95 = por %p93, %p94
      %p97 = scmp.ne.s32.totalorder %s80, %s96
      %p98 = scmp.eq.s32.totalorder %s32, 0
      %p99 = por %p97, %p98
      %s100 = ssub.s32 %s34, %s41
      %p101 = scmp.eq.s32.totalorder %s100, 0
      %s103 = sadd.s32 %s102, 1
      %s104 = scalar_select %p101, %s102, %s103
      %p107 = pneg %p101
      %p108 = scmp.eq.s32.totalorder %s26, 7
      %p109 = por %p107, %p108
      %p110 = scmp.ne.s32.totalorder %s102, %s105
      %p111 = scmp.eq.s32.totalorder %s26, 0
      %p112 = por %p110, %p111
      %p113 = scmp.ne.s32.totalorder %s102, %s105
      %p114 = scmp.eq.s32.totalorder %s31, 7
      %p115 = por %p113, %p114
      %p116 = scmp.ne.s32.totalorder %s105, %s106
      %p117 = scmp.eq.s32.totalorder %s31, 0
      %p118 = por %p116, %p117
      %p119 = scmp.ne.s32.totalorder %s105, %s106
      %p120 = scmp.eq.s32.totalorder %s32, 7
      %p121 = por %p119, %p120
      %p123 = scmp.ne.s32.totalorder %s106, %s122
      %p124 = scmp.eq.s32.totalorder %s32, 0
      %p125 = por %p123, %p124
      %s127 = sadd.s32 %s126, 1
      %p130 = scmp.eq.s32.totalorder %s26, 7
      %p131 = scmp.ne.s32.totalorder %s126, %s128
      %p132 = scmp.eq.s32.totalorder %s26, 0
      %p133 = por %p131, %p132
      %p134 = scmp.ne.s32.totalorder %s126, %s128
      %p135 = scmp.eq.s32.totalorder %s31, 7
      %p136 = por %p134, %p135
      %p137 = scmp.ne.s32.totalorder %s128, %s129
      %p138 = scmp.eq.s32.totalorder %s31, 0
      %p139 = por %p137, %p138
      %p140 = scmp.ne.s32.totalorder %s128, %s129
      %p141 = scmp.eq.s32.totalorder %s32, 7
      %p142 = por %p140, %p141
      %p144 = scmp.ne.s32.totalorder %s129, %s143
      %p145 = scmp.eq.s32.totalorder %s32, 0
      %p146 = por %p144, %p145
      %s148 = sadd.s32 %s147, 1
      %p151 = scmp.eq.s32.totalorder %s26, 7
      %p152 = scmp.ne.s32.totalorder %s147, %s149
      %p153 = scmp.eq.s32.totalorder %s26, 0
      %p154 = por %p152, %p153
      %p155 = scmp.ne.s32.totalorder %s147, %s149
      %p156 = scmp.eq.s32.totalorder %s31, 7
      %p157 = por %p155, %p156
      %p158 = scmp.ne.s32.totalorder %s149, %s150
      %p159 = scmp.eq.s32.totalorder %s31, 0
      %p160 = por %p158, %p159
      %p161 = scmp.ne.s32.totalorder %s149, %s150
      %p162 = scmp.eq.s32.totalorder %s32, 7
      %p163 = por %p161, %p162
      %p165 = scmp.ne.s32.totalorder %s150, %s164
      %p166 = scmp.eq.s32.totalorder %s32, 0
      %p167 = por %p165, %p166
      %s169 = sadd.s32 %s168, 1
      %p172 = scmp.eq.s32.totalorder %s26, 7
      %p173 = scmp.ne.s32.totalorder %s168, %s170
      %p174 = scmp.eq.s32.totalorder %s26, 0
      %p175 = por %p173, %p174
      %p176 = scmp.ne.s32.totalorder %s168, %s170
      %p177 = scmp.eq.s32.totalorder %s31, 7
      %p178 = por %p176, %p177
      %p179 = scmp.ne.s32.totalorder %s170, %s171
      %p180 = scmp.eq.s32.totalorder %s31, 0
      %p181 = por %p179, %p180
      %p182 = scmp.ne.s32.totalorder %s170, %s171
      %p183 = scmp.eq.s32.totalorder %s32, 7
      %p184 = por %p182, %p183
      %p186 = scmp.ne.s32.totalorder %s171, %s185
      %p187 = scmp.eq.s32.totalorder %s32, 0
      %p188 = por %p186, %p187
      %s190 = sadd.s32 %s189, 1
      %p193 = scmp.eq.s32.totalorder %s26, 7
      %p194 = scmp.ne.s32.totalorder %s189, %s191
      %p195 = scmp.eq.s32.totalorder %s26, 0
      %p196 = por %p194, %p195
      %p197 = scmp.ne.s32.totalorder %s189, %s191
      %p198 = scmp.eq.s32.totalorder %s31, 7
      %p199 = por %p197, %p198
      %p200 = scmp.ne.s32.totalorder %s191, %s192
      %p201 = scmp.eq.s32.totalorder %s31, 0
      %p202 = por %p200, %p201
      %p203 = scmp.ne.s32.totalorder %s191, %s192
      %p204 = scmp.eq.s32.totalorder %s32, 7
      %p205 = por %p203, %p204
      %p207 = scmp.ne.s32.totalorder %s192, %s206
      %p208 = scmp.eq.s32.totalorder %s32, 0
      %p209 = por %p207, %p208
      %s211 = sadd.s32 %s210, 1
      %p214 = scmp.eq.s32.totalorder %s26, 7
      %p215 = scmp.ne.s32.totalorder %s210, %s212
      %p216 = scmp.eq.s32.totalorder %s26, 0
      %p217 = por %p215, %p216
      %p218 = scmp.ne.s32.totalorder %s210, %s212
      %p219 = scmp.eq.s32.totalorder %s31, 7
      %p220 = por %p218, %p219
      %p221 = scmp.ne.s32.totalorder %s212, %s213
      %p222 = scmp.eq.s32.totalorder %s31, 0
      %p223 = por %p221, %p222
      %p224 = scmp.ne.s32.totalorder %s212, %s213
      %p225 = scmp.eq.s32.totalorder %s32, 7
      %p226 = por %p224, %p225
      %p228 = scmp.ne.s32.totalorder %s213, %s227
      %p229 = scmp.eq.s32.totalorder %s32, 0
      %p230 = por %p228, %p229
      %s232 = sadd.s32 %s231, 1
      %p235 = scmp.eq.s32.totalorder %s26, 7
      %p236 = scmp.ne.s32.totalorder %s231, %s233
      %p237 = scmp.eq.s32.totalorder %s26, 0
      %p238 = por %p236, %p237
      %p239 = scmp.ne.s32.totalorder %s231, %s233
      %p240 = scmp.eq.s32.totalorder %s31, 7
      %p241 = por %p239, %p240
      %p242 = scmp.ne.s32.totalorder %s233, %s234
      %p243 = scmp.eq.s32.totalorder %s31, 0
      %p244 = por %p242, %p243
      %p245 = scmp.ne.s32.totalorder %s233, %s234
      %p246 = scmp.eq.s32.totalorder %s32, 7
      %p247 = por %p245, %p246
      %p249 = scmp.ne.s32.totalorder %s234, %s248
      %p250 = scmp.eq.s32.totalorder %s32, 0
      %p251 = por %p249, %p250
      %s253 = sadd.s32 %s252, 1
      %p256 = scmp.eq.s32.totalorder %s26, 7
      %p257 = scmp.ne.s32.totalorder %s252, %s254
      %p258 = scmp.eq.s32.totalorder %s26, 0
      %p259 = por %p257, %p258
      %p260 = scmp.ne.s32.totalorder %s252, %s254
      %p261 = scmp.eq.s32.totalorder %s31, 7
      %p262 = por %p260, %p261
      %p263 = scmp.ne.s32.totalorder %s254, %s255
      %p264 = scmp.eq.s32.totalorder %s31, 0
      %p265 = por %p263, %p264
      %p266 = scmp.ne.s32.totalorder %s254, %s255
      %p267 = scmp.eq.s32.totalorder %s32, 7
      %p268 = por %p266, %p267
      %p270 = scmp.ne.s32.totalorder %s255, %s269
      %p271 = scmp.eq.s32.totalorder %s32, 0
      %p272 = por %p270, %p271
      %s273 = ssub.s32 %s33, %s45
      %p274 = scmp.eq.s32.totalorder %s273, 0
      %s276 = sadd.s32 %s275, 1
      %s277 = scalar_select %p274, %s275, %s276
      %p280 = pneg %p274
      %p281 = scmp.eq.s32.totalorder %s26, 7
      %p282 = por %p280, %p281
      %p283 = scmp.ne.s32.totalorder %s275, %s278
      %p284 = scmp.eq.s32.totalorder %s26, 0
      %p285 = por %p283, %p284
      %p286 = scmp.ne.s32.totalorder %s275, %s278
      %p287 = scmp.eq.s32.totalorder %s31, 7
      %p288 = por %p286, %p287
      %p289 = scmp.ne.s32.totalorder %s278, %s279
      %p290 = scmp.eq.s32.totalorder %s31, 0
      %p291 = por %p289, %p290
      %p292 = scmp.ne.s32.totalorder %s278, %s279
      %p293 = scmp.eq.s32.totalorder %s32, 7
      %p294 = por %p292, %p293
      %p296 = scmp.ne.s32.totalorder %s279, %s295
      %p297 = scmp.eq.s32.totalorder %s32, 0
      %p298 = por %p296, %p297
      %s299 = ssub.s32 %s33, %s45
      %p300 = scmp.eq.s32.totalorder %s299, 0
      %s302 = sadd.s32 %s301, 1
      %s303 = scalar_select %p300, %s301, %s302
      %p306 = pneg %p300
      %p307 = scmp.eq.s32.totalorder %s26, 7
      %p308 = por %p306, %p307
      %p309 = scmp.ne.s32.totalorder %s301, %s304
      %p310 = scmp.eq.s32.totalorder %s26, 0
      %p311 = por %p309, %p310
      %p312 = scmp.ne.s32.totalorder %s301, %s304
      %p313 = scmp.eq.s32.totalorder %s31, 7
      %p314 = por %p312, %p313
      %p315 = scmp.ne.s32.totalorder %s304, %s305
      %p316 = scmp.eq.s32.totalorder %s31, 0
      %p317 = por %p315, %p316
      %p318 = scmp.ne.s32.totalorder %s304, %s305
      %p319 = scmp.eq.s32.totalorder %s32, 7
      %p320 = por %p318, %p319
      %p322 = scmp.ne.s32.totalorder %s305, %s321
      %p323 = scmp.eq.s32.totalorder %s32, 0
      %p324 = por %p322, %p323
      %s325 = ssub.s32 %s33, %s45
      %p326 = scmp.eq.s32.totalorder %s325, 0
      %s328 = sadd.s32 %s327, 1
      %s329 = scalar_select %p326, %s327, %s328
      %p332 = pneg %p326
      %p333 = scmp.eq.s32.totalorder %s26, 7
      %p334 = por %p332, %p333
      %p335 = scmp.ne.s32.totalorder %s327, %s330
      %p336 = scmp.eq.s32.totalorder %s26, 0
      %p337 = por %p335, %p336
      %p338 = scmp.ne.s32.totalorder %s327, %s330
      %p339 = scmp.eq.s32.totalorder %s31, 7
      %p340 = por %p338, %p339
      %p341 = scmp.ne.s32.totalorder %s330, %s331
      %p342 = scmp.eq.s32.totalorder %s31, 0
      %p343 = por %p341, %p342
      %p344 = scmp.ne.s32.totalorder %s330, %s331
      %p345 = scmp.eq.s32.totalorder %s32, 7
      %p346 = por %p344, %p345
      %p348 = scmp.ne.s32.totalorder %s331, %s347
      %p349 = scmp.eq.s32.totalorder %s32, 0
      %p350 = por %p348, %p349
      %p351 = scmp.le.s32.totalorder 1, %s26
      %p352 = scmp.lt.s32.totalorder %s26, 9
      %p353 = pnand %p351, %p352
      %p354 = pneg %p353
      // Predicated region
      $region9: #{tpu_custom_call.1} parent=5 // pred_check
        _
      $region10: #{tpu_custom_call.1} parent=5 // pred_check_branch
        %356 = sbr.rel (%p353) target = $region12
      $region11: #{tpu_custom_call.1} parent=5 // pred_region
        %s357 = ssub.s32 %s26, 1
        // Predicated region
        $region13: #{tpu_custom_call.1} parent=11 // pred_check
          %p358 = pneg %p92
        $region14: #{tpu_custom_call.1} parent=11 // pred_check_branch
          %360 = sbr.rel (%p358) target = $region16
        $region15: #{tpu_custom_call.1} parent=11 // pred_region
          %s362 = ssub.s32 128, 128
          %363 = vsyncadd [#allocation8], %s362
          %s364 = smul.addr %s35, 128
          %s365 = scalar_lea.hbm %s1, %s364
          %s367 = sshll.u32 [#allocation7], 4
          %s368 = int_to_ptr.vmem [resolvable:$true] %s367
          %370 = dma.hbm_to_vmem [thread:$0]  %s365, 128, %s368, [#allocation8]
        $region16: #{tpu_custom_call.1} parent=11 // pred_fallthru
          _
        // Predicated region
        $region17: #{tpu_custom_call.1} parent=11 // pred_check
          %p371 = pneg %p139
        $region18: #{tpu_custom_call.1} parent=11 // pred_check_branch
          %373 = sbr.rel (%p371) target = $region20
        $region19: #{tpu_custom_call.1} parent=11 // pred_region
          _
        $region20: #{tpu_custom_call.1} parent=11 // pred_fallthru
          _
        // Predicated region
        $region21: #{tpu_custom_call.1} parent=11 // pred_check
          %p374 = pneg %p160
        $region22: #{tpu_custom_call.1} parent=11 // pred_check_branch
          %376 = sbr.rel (%p374) target = $region24
        $region23: #{tpu_custom_call.1} parent=11 // pred_region
          %s378 = ssub.s32 1024, 1024
          %379 = vsyncadd [#allocation8], %s378
          %s380 = sshll.u32 [#allocation10], 4
          %s381 = int_to_ptr.vmem [resolvable:$true] %s380
          %386 = dma.hbm_to_vmem [thread:$0]  %s4, 1024, %s381, [#allocation8], 64, 64, 4
        $region24: #{tpu_custom_call.1} parent=11 // pred_fallthru
          _
        // Predicated region
        $region25: #{tpu_custom_call.1} parent=11 // pred_check
          %p387 = pneg %p181
        $region26: #{tpu_custom_call.1} parent=11 // pred_check_branch
          %389 = sbr.rel (%p387) target = $region28
        $region27: #{tpu_custom_call.1} parent=11 // pred_region
          _
        $region28: #{tpu_custom_call.1} parent=11 // pred_fallthru
          _
        // Predicated region
        $region29: #{tpu_custom_call.1} parent=11 // pred_check
          %p390 = pneg %p202
        $region30: #{tpu_custom_call.1} parent=11 // pred_check_branch
          %392 = sbr.rel (%p390) target = $region32
        $region31: #{tpu_custom_call.1} parent=11 // pred_region
          %s394 = ssub.s32 1024, 1024
          %395 = vsyncadd [#allocation12], %s394
          %s396 = sshll.u32 [#allocation11], 4
          %s397 = int_to_ptr.vmem [resolvable:$true] %s396
          %402 = dma.hbm_to_vmem [thread:$0]  %s6, 1024, %s397, [#allocation12], 64, 64, 4
        $region32: #{tpu_custom_call.1} parent=11 // pred_fallthru
          _
        // Predicated region
        $region33: #{tpu_custom_call.1} parent=11 // pred_check
          %p403 = pneg %p223
        $region34: #{tpu_custom_call.1} parent=11 // pred_check_branch
          %405 = sbr.rel (%p403) target = $region36
        $region35: #{tpu_custom_call.1} parent=11 // pred_region
          _
        $region36: #{tpu_custom_call.1} parent=11 // pred_fallthru
          _
        // Predicated region
        $region37: #{tpu_custom_call.1} parent=11 // pred_check
          %p406 = pneg %p244
        $region38: #{tpu_custom_call.1} parent=11 // pred_check_branch
          %408 = sbr.rel (%p406) target = $region40
        $region39: #{tpu_custom_call.1} parent=11 // pred_region
          %s410 = ssub.s32 1024, 1024
          %411 = vsyncadd [#allocation12], %s410
          %s412 = sshll.u32 [#allocation13], 4
          %s413 = int_to_ptr.vmem [resolvable:$true] %s412
          %418 = dma.hbm_to_vmem [thread:$0]  %s8, 1024, %s413, [#allocation12], 64, 64, 4
        $region40: #{tpu_custom_call.1} parent=11 // pred_fallthru
          _
        // Predicated region
        $region41: #{tpu_custom_call.1} parent=11 // pred_check
          %p419 = pneg %p265
        $region42: #{tpu_custom_call.1} parent=11 // pred_check_branch
          %421 = sbr.rel (%p419) target = $region44
        $region43: #{tpu_custom_call.1} parent=11 // pred_region
          _
        $region44: #{tpu_custom_call.1} parent=11 // pred_fallthru
          _
      $region12: #{tpu_custom_call.1} parent=5 // pred_fallthru
        _
      %p422 = scmp.lt.s32.totalorder %s26, 8
      // Predicated region
      $region45: #{tpu_custom_call.1} parent=5 // pred_check
        %p423 = pneg %p422
      $region46: #{tpu_custom_call.1} parent=5 // pred_check_branch
        %425 = sbr.rel (%p423) target = $region48
      $region47: #{tpu_custom_call.1} parent=5 // pred_region
        // Predicated region
        $region49: #{tpu_custom_call.1} parent=47 // pred_check
          %p426 = pneg %p60
        $region50: #{tpu_custom_call.1} parent=47 // pred_check_branch
          %428 = sbr.rel (%p426) target = $region52
        $region51: #{tpu_custom_call.1} parent=47 // pred_region
          %s429 = sand.u32 %s26, 1
          %s430 = scalar_lea.sflag [#allocation5], %s429
          %s431 = sand.u32 %s50, 1
          %s432 = smul.addr %s431, 4
          %s433 = scalar_lea.vmem [#allocation4], %s432
          %s435 = ssub.s32 64, 64
          %436 = vsyncadd %s430, %s435
          %s437 = smul.addr %s33, 8
          %s438 = sadd.s32 %s34, %s437
          %s439 = smul.addr %s438, 64
          %s440 = scalar_lea.hbm %s0, %s439
          %s442 = sshll.u32 %s433, 4
          %s443 = int_to_ptr.vmem [resolvable:$true] %s442
          %445 = dma.hbm_to_vmem [thread:$0]  %s440, 64, %s443, %s430
        $region52: #{tpu_custom_call.1} parent=47 // pred_fallthru
          _
        // Predicated region
        $region53: #{tpu_custom_call.1} parent=47 // pred_check
          %p446 = pneg %p112
        $region54: #{tpu_custom_call.1} parent=47 // pred_check_branch
          %448 = sbr.rel (%p446) target = $region56
        $region55: #{tpu_custom_call.1} parent=47 // pred_region
          %s449 = sand.u32 %s26, 1
          %s450 = scalar_lea.sflag [#allocation5], %s449
          %s451 = sand.u32 %s102, 1
          %s452 = smul.addr %s451, 64
          %s453 = scalar_lea.vmem [#allocation9], %s452
          %s454 = smul.u32 16, %s34
          %s456 = ssub.s32 1024, 1024
          %457 = vsyncadd %s450, %s456
          %s458 = smul.addr %s454, 64
          %s459 = scalar_lea.hbm %s2, %s458
          %s460 = sshll.u32 %s453, 4
          %s461 = int_to_ptr.vmem [resolvable:$true] %s460
          %466 = dma.hbm_to_vmem [thread:$0]  %s459, 1024, %s461, %s450, 64, 64, 4
        $region56: #{tpu_custom_call.1} parent=47 // pred_fallthru
          _
      $region48: #{tpu_custom_call.1} parent=5 // pred_fallthru
        _
      %p467 = scmp.le.s32.totalorder 1, %s26
      %p468 = scmp.lt.s32.totalorder %s26, 9
      %p469 = pnand %p467, %p468
      %p470 = pneg %p469
      // Predicated region
      $region57: #{tpu_custom_call.1} parent=5 // pred_check
        _
      $region58: #{tpu_custom_call.1} parent=5 // pred_check_branch
        %472 = sbr.rel (%p469) target = $region60
      $region59: #{tpu_custom_call.1} parent=5 // pred_region
        %s473 = ssub.s32 %s26, 1
        %s474 = sand.u32 %s31, 1
        %s475 = scalar_lea.sflag [#allocation5], %s474
        %s476 = sand.u32 %s53, 1
        %s477 = smul.addr %s476, 4
        %s478 = scalar_lea.vmem [#allocation4], %s477
        // Predicated region
        $region61: #{tpu_custom_call.1} parent=59 // pred_check
          %p479 = pneg %p66
        $region62: #{tpu_custom_call.1} parent=59 // pred_check_branch
          %481 = sbr.rel (%p479) target = $region64
        $region63: #{tpu_custom_call.1} parent=59 // pred_region
          %482 = dma.done %s475, 64
        $region64: #{tpu_custom_call.1} parent=59 // pred_fallthru
          _
        // Predicated region
        $region65: #{tpu_custom_call.1} parent=59 // pred_check
          %p483 = pneg %p92
        $region66: #{tpu_custom_call.1} parent=59 // pred_check_branch
          %485 = sbr.rel (%p483) target = $region68
        $region67: #{tpu_custom_call.1} parent=59 // pred_region
          %486 = dma.done [#allocation8], 128
        $region68: #{tpu_custom_call.1} parent=59 // pred_fallthru
          _
        %s487 = sand.u32 %s31, 1
        %s488 = scalar_lea.sflag [#allocation5], %s487
        %s489 = sand.u32 %s105, 1
        %s490 = smul.addr %s489, 64
        %s491 = scalar_lea.vmem [#allocation9], %s490
        // Predicated region
        $region69: #{tpu_custom_call.1} parent=59 // pred_check
          %p492 = pneg %p118
        $region70: #{tpu_custom_call.1} parent=59 // pred_check_branch
          %494 = sbr.rel (%p492) target = $region72
        $region71: #{tpu_custom_call.1} parent=59 // pred_region
          %495 = dma.done %s488, 1024
        $region72: #{tpu_custom_call.1} parent=59 // pred_fallthru
          _
        // Predicated region
        $region73: #{tpu_custom_call.1} parent=59 // pred_check
          %p496 = pneg %p160
        $region74: #{tpu_custom_call.1} parent=59 // pred_check_branch
          %498 = sbr.rel (%p496) target = $region76
        $region75: #{tpu_custom_call.1} parent=59 // pred_region
          %499 = dma.done [#allocation8], 1024
        $region76: #{tpu_custom_call.1} parent=59 // pred_fallthru
          _
        // Predicated region
        $region77: #{tpu_custom_call.1} parent=59 // pred_check
          %p500 = pneg %p202
        $region78: #{tpu_custom_call.1} parent=59 // pred_check_branch
          %502 = sbr.rel (%p500) target = $region80
        $region79: #{tpu_custom_call.1} parent=59 // pred_region
          %503 = dma.done [#allocation12], 1024
        $region80: #{tpu_custom_call.1} parent=59 // pred_fallthru
          _
        // Predicated region
        $region81: #{tpu_custom_call.1} parent=59 // pred_check
          %p504 = pneg %p244
        $region82: #{tpu_custom_call.1} parent=59 // pred_check_branch
          %506 = sbr.rel (%p504) target = $region84
        $region83: #{tpu_custom_call.1} parent=59 // pred_region
          %507 = dma.done [#allocation12], 1024
        $region84: #{tpu_custom_call.1} parent=59 // pred_fallthru
          _
        %s508 = sand.u32 %s31, 1
        %s509 = scalar_lea.sflag [#allocation5], %s508
        %s510 = sand.u32 %s53, 1
        %s511 = smul.addr %s510, 4
        %s512 = scalar_lea.vmem [#allocation4], %s511
        %p513 = pneg %p66
        %p514 = pneg %p63
        %p515 = pneg %p92
        %p516 = pneg %p89
        %s517 = sand.u32 %s31, 1
        %s518 = scalar_lea.sflag [#allocation5], %s517
        %s519 = sand.u32 %s105, 1
        %s520 = smul.addr %s519, 64
        %s521 = scalar_lea.vmem [#allocation9], %s520
        %p522 = pneg %p118
        %p523 = pneg %p115
        %p524 = pneg %p139
        %p525 = pneg %p136
        %p526 = pneg %p160
        %p527 = pneg %p157
        %p528 = pneg %p181
        %p529 = pneg %p178
        %p530 = pneg %p202
        %p531 = pneg %p199
        %p532 = pneg %p223
        %p533 = pneg %p220
        %p534 = pneg %p244
        %p535 = pneg %p241
        %p536 = pneg %p265
        %p537 = pneg %p262
        %p538 = pneg %p291
        %p539 = pneg %p288
        %p540 = pneg %p317
        %p541 = pneg %p314
        %p542 = pneg %p343
        %p543 = pneg %p340
        %s544 = smul.u32 16, %s36
        %p546 = scmp.eq.s32.totalorder %s36, 0
        // Predicated region
        $region85: #{tpu_custom_call.1} parent=59 // pred_check
          %p547 = pneg %p546
        $region86: #{tpu_custom_call.1} parent=59 // pred_check_branch
          %549 = sbr.rel (%p547) target = $region88
        $region87: #{tpu_custom_call.1} parent=59 // pred_region
          %550 = vst [vmem:[#allocation2] sm:$0xff] 0.0
          %551 = vst [vmem:[#allocation3] sm:$0xff] 0.0
        $region88: #{tpu_custom_call.1} parent=59 // pred_fallthru
          _
        %v552 = vld [vmem:[%s478] sm:$0xf]
        %v553 = vunpack.c.l.bf16 %v552
        %v554 = vmul.f32 %v553, %v553
        %v555 = vld [vmem:[#allocation3] sm:$0xff]
        %v556 = vadd.f32 %v555, %v554
        %557 = vst [vmem:[#allocation3] sm:$0xff] %v556
        %v558 = vld [vmem:[#allocation2] sm:$0xff]
        %v559 = vld [vmem:[%s491] sm:$0xf]
        %v560 = vld [vmem:[%s491 + $0x4] sm:$0xf]
        %v561 = vld [vmem:[%s491 + $0x8] sm:$0xf]
        %v562 = vld [vmem:[%s491 + $0xc] sm:$0xf]
        %v563 = vld [vmem:[%s491 + $0x10] sm:$0xf]
        %v564 = vld [vmem:[%s491 + $0x14] sm:$0xf]
        %v565 = vld [vmem:[%s491 + $0x18] sm:$0xf]
        %v566 = vld [vmem:[%s491 + $0x1c] sm:$0xf]
        %v567 = vld [vmem:[%s491 + $0x20] sm:$0xf]
        %v568 = vld [vmem:[%s491 + $0x24] sm:$0xf]
        %v569 = vld [vmem:[%s491 + $0x28] sm:$0xf]
        %v570 = vld [vmem:[%s491 + $0x2c] sm:$0xf]
        %v571 = vld [vmem:[%s491 + $0x30] sm:$0xf]
        %v572 = vld [vmem:[%s491 + $0x34] sm:$0xf]
        %v573 = vld [vmem:[%s491 + $0x38] sm:$0xf]
        %v574 = vld [vmem:[%s491 + $0x3c] sm:$0xf]
        %v591 = vunpack.c.l.b16 %v559
        %v592 = vunpack.c.l.b16 %v560
        %v593 = vunpack.c.l.b16 %v561
        %v594 = vunpack.c.l.b16 %v562
        %v595 = vunpack.c.l.b16 %v563
        %v596 = vunpack.c.l.b16 %v564
        %v597 = vunpack.c.l.b16 %v565
        %v598 = vunpack.c.l.b16 %v566
        %v599 = vunpack.c.l.b16 %v567
        %v600 = vunpack.c.l.b16 %v568
        %v601 = vunpack.c.l.b16 %v569
        %v602 = vunpack.c.l.b16 %v570
        %v603 = vunpack.c.l.b16 %v571
        %v604 = vunpack.c.l.b16 %v572
        %v605 = vunpack.c.l.b16 %v573
        %v606 = vunpack.c.l.b16 %v574
        %v607 = vpack.c.b16 %v592, %v591
        %v608 = vpack.c.b16 %v594, %v593
        %v609 = vpack.c.b16 %v596, %v595
        %v610 = vpack.c.b16 %v598, %v597
        %v611 = vpack.c.b16 %v600, %v599
        %v612 = vpack.c.b16 %v602, %v601
        %v613 = vpack.c.b16 %v604, %v603
        %v614 = vpack.c.b16 %v606, %v605
        %623 = vmatprep.subr.bf16.mxu0 0
        %624 = vmatpush1.bf16.msra.mxu0 %v607
        %625 = vmatprep.subr.bf16.mxu0 0
        %626 = vmatpush1.bf16.msra.mxu0 %v608
        %627 = vmatprep.subr.bf16.mxu0 0
        %628 = vmatpush1.bf16.msra.mxu0 %v609
        %629 = vmatprep.subr.bf16.mxu0 0
        %630 = vmatpush1.bf16.msra.mxu0 %v610
        %631 = vmatprep.subr.bf16.mxu0 0
        %632 = vmatpush1.bf16.msra.mxu0 %v611
        %633 = vmatprep.subr.bf16.mxu0 0
        %634 = vmatpush1.bf16.msra.mxu0 %v612
        %635 = vmatprep.subr.bf16.mxu0 0
        %636 = vmatpush1.bf16.msra.mxu0 %v613
        %637 = vmatprep.subr.bf16.mxu0 0
        %638 = vmatpush1.bf16.msra.mxu0 %v614
        %639 = vmatprep.subr.bf16.mxu0 0
        %640 = vmatpush1.bf16.msra.mxu0 0
        %641 = vmatprep.subr.bf16.mxu0 0
        %642 = vmatpush1.bf16.msra.mxu0 0
        %643 = vmatprep.subr.bf16.mxu0 0
        %644 = vmatpush1.bf16.msra.mxu0 0
        %645 = vmatprep.subr.bf16.mxu0 0
        %646 = vmatpush1.bf16.msra.mxu0 0
        %647 = vmatprep.subr.bf16.mxu0 0
        %648 = vmatpush1.bf16.msra.mxu0 0
        %649 = vmatprep.subr.bf16.mxu0 0
        %650 = vmatpush1.bf16.msra.mxu0 0
        %651 = vmatprep.subr.bf16.mxu0 0
        %652 = vmatpush1.bf16.msra.mxu0 0
        %653 = vmatprep.subr.bf16.mxu0 0
        %654 = vmatpush1.bf16.msra.mxu0 0
        %655 = vmatprep.mubr.bf16.mxu0 0
        %656 = vmatmul.mubr.bf16.gmra.mrb[0].mxu0 %v552
        %v657 = vpop.f32.mrb[0].mxu0
        %v658 = vadd.f32 0.0, %v657
        %v659 = vpop.f32.mrb[0].mxu0
        %v660 = vpop.f32.mrb[0].mxu0
        %v661 = vpop.f32.mrb[0].mxu0
        %662 = vdwg.mxu0
        %v663 = vadd.f32 %v558, %v658
        %664 = vst [vmem:[#allocation2] sm:$0xff] %v663
        %p665 = scmp.eq.s32.totalorder %s36, 7
        // Predicated region
        $region89: #{tpu_custom_call.1} parent=59 // pred_check
          %p666 = pneg %p665
        $region90: #{tpu_custom_call.1} parent=59 // pred_check_branch
          %668 = sbr.rel (%p666) target = $region92
        $region91: #{tpu_custom_call.1} parent=59 // pred_region
          %v669 = vld [vmem:[#allocation3] sm:$0xff]
          %670 = vadd.xlane.f32.xlu0 %v669
          %v671 = vpop.xlane.xlu0 %670
          %v672 = vmax.f32 %v671, 1e-24
          %v673 = vrsqrt.pop %v672
          %v674 = vld [vmem:[#allocation2] sm:$0xff]
          %v675 = vmul.f32 %v674, %v673
          %v676 = vld [vmem:[%s3] sm:$0x1]
          %v678 = vlaneseq
          %v679 = vshrl.u32 %v678, 7
          %v680 = vsub.s32 0, %v679
          %v681 = vrot.slane %v676, %v680
          %v683 = vadd.f32 %v675, %v681
          %v684 = vtanh.pop %v683
          %v685 = vpack.c.bf16 %v684, %v684
          %v686 = vld [vmem:[#allocation10] sm:$0xf]
          %v687 = vld [vmem:[#allocation10 + $0x4] sm:$0xf]
          %v688 = vld [vmem:[#allocation10 + $0x8] sm:$0xf]
          %v689 = vld [vmem:[#allocation10 + $0xc] sm:$0xf]
          %v690 = vld [vmem:[#allocation10 + $0x10] sm:$0xf]
          %v691 = vld [vmem:[#allocation10 + $0x14] sm:$0xf]
          %v692 = vld [vmem:[#allocation10 + $0x18] sm:$0xf]
          %v693 = vld [vmem:[#allocation10 + $0x1c] sm:$0xf]
          %v694 = vld [vmem:[#allocation10 + $0x20] sm:$0xf]
          %v695 = vld [vmem:[#allocation10 + $0x24] sm:$0xf]
          %v696 = vld [vmem:[#allocation10 + $0x28] sm:$0xf]
          %v697 = vld [vmem:[#allocation10 + $0x2c] sm:$0xf]
          %v698 = vld [vmem:[#allocation10 + $0x30] sm:$0xf]
          %v699 = vld [vmem:[#allocation10 + $0x34] sm:$0xf]
          %v700 = vld [vmem:[#allocation10 + $0x38] sm:$0xf]
          %v701 = vld [vmem:[#allocation10 + $0x3c] sm:$0xf]
          %v702 = vld [vmem:[%s5] sm:$0x1]
          %v704 = vlaneseq
          %v705 = vshrl.u32 %v704, 7
          %v706 = vsub.s32 0, %v705
          %v707 = vrot.slane %v702, %v706
          %v725 = vunpack.c.l.b16 %v686
          %v726 = vunpack.c.l.b16 %v687
          %v727 = vunpack.c.l.b16 %v688
          %v728 = vunpack.c.l.b16 %v689
          %v729 = vunpack.c.l.b16 %v690
          %v730 = vunpack.c.l.b16 %v691
          %v731 = vunpack.c.l.b16 %v692
          %v732 = vunpack.c.l.b16 %v693
          %v733 = vunpack.c.l.b16 %v694
          %v734 = vunpack.c.l.b16 %v695
          %v735 = vunpack.c.l.b16 %v696
          %v736 = vunpack.c.l.b16 %v697
          %v737 = vunpack.c.l.b16 %v698
          %v738 = vunpack.c.l.b16 %v699
          %v739 = vunpack.c.l.b16 %v700
          %v740 = vunpack.c.l.b16 %v701
          %v741 = vpack.c.b16 %v726, %v725
          %v742 = vpack.c.b16 %v728, %v727
          %v743 = vpack.c.b16 %v730, %v729
          %v744 = vpack.c.b16 %v732, %v731
          %v745 = vpack.c.b16 %v734, %v733
          %v746 = vpack.c.b16 %v736, %v735
          %v747 = vpack.c.b16 %v738, %v737
          %v748 = vpack.c.b16 %v740, %v739
          %757 = vmatprep.subr.bf16.mxu0 0
          %758 = vmatpush1.bf16.msra.mxu0 %v741
          %759 = vmatprep.subr.bf16.mxu0 0
          %760 = vmatpush1.bf16.msra.mxu0 %v742
          %761 = vmatprep.subr.bf16.mxu0 0
          %762 = vmatpush1.bf16.msra.mxu0 %v743
          %763 = vmatprep.subr.bf16.mxu0 0
          %764 = vmatpush1.bf16.msra.mxu0 %v744
          %765 = vmatprep.subr.bf16.mxu0 0
          %766 = vmatpush1.bf16.msra.mxu0 %v745
          %767 = vmatprep.subr.bf16.mxu0 0
          %768 = vmatpush1.bf16.msra.mxu0 %v746
          %769 = vmatprep.subr.bf16.mxu0 0
          %770 = vmatpush1.bf16.msra.mxu0 %v747
          %771 = vmatprep.subr.bf16.mxu0 0
          %772 = vmatpush1.bf16.msra.mxu0 %v748
          %773 = vmatprep.subr.bf16.mxu0 0
          %774 = vmatpush1.bf16.msra.mxu0 0
          %775 = vmatprep.subr.bf16.mxu0 0
          %776 = vmatpush1.bf16.msra.mxu0 0
          %777 = vmatprep.subr.bf16.mxu0 0
          %778 = vmatpush1.bf16.msra.mxu0 0
          %779 = vmatprep.subr.bf16.mxu0 0
          %780 = vmatpush1.bf16.msra.mxu0 0
          %781 = vmatprep.subr.bf16.mxu0 0
          %782 = vmatpush1.bf16.msra.mxu0 0
          %783 = vmatprep.subr.bf16.mxu0 0
          %784 = vmatpush1.bf16.msra.mxu0 0
          %785 = vmatprep.subr.bf16.mxu0 0
          %786 = vmatpush1.bf16.msra.mxu0 0
          %787 = vmatprep.subr.bf16.mxu0 0
          %788 = vmatpush1.bf16.msra.mxu0 0
          %789 = vmatprep.mubr.bf16.mxu0 0
          %790 = vmatmul.mubr.bf16.gmra.mrb[0].mxu0 %v685
          %v791 = vpop.f32.mrb[0].mxu0
          %v792 = vadd.f32 %v707, %v791
          %v793 = vpop.f32.mrb[0].mxu0
          %v794 = vpop.f32.mrb[0].mxu0
          %v795 = vpop.f32.mrb[0].mxu0
          %796 = vdwg.mxu0
          %v797 = vld [vmem:[#allocation11] sm:$0xf]
          %v798 = vld [vmem:[#allocation11 + $0x4] sm:$0xf]
          %v799 = vld [vmem:[#allocation11 + $0x8] sm:$0xf]
          %v800 = vld [vmem:[#allocation11 + $0xc] sm:$0xf]
          %v801 = vld [vmem:[#allocation11 + $0x10] sm:$0xf]
          %v802 = vld [vmem:[#allocation11 + $0x14] sm:$0xf]
          %v803 = vld [vmem:[#allocation11 + $0x18] sm:$0xf]
          %v804 = vld [vmem:[#allocation11 + $0x1c] sm:$0xf]
          %v805 = vld [vmem:[#allocation11 + $0x20] sm:$0xf]
          %v806 = vld [vmem:[#allocation11 + $0x24] sm:$0xf]
          %v807 = vld [vmem:[#allocation11 + $0x28] sm:$0xf]
          %v808 = vld [vmem:[#allocation11 + $0x2c] sm:$0xf]
          %v809 = vld [vmem:[#allocation11 + $0x30] sm:$0xf]
          %v810 = vld [vmem:[#allocation11 + $0x34] sm:$0xf]
          %v811 = vld [vmem:[#allocation11 + $0x38] sm:$0xf]
          %v812 = vld [vmem:[#allocation11 + $0x3c] sm:$0xf]
          %v813 = vld [vmem:[%s7] sm:$0x1]
          %v815 = vlaneseq
          %v816 = vshrl.u32 %v815, 7
          %v817 = vsub.s32 0, %v816
          %v818 = vrot.slane %v813, %v817
          %v836 = vunpack.c.l.b16 %v797
          %v837 = vunpack.c.l.b16 %v798
          %v838 = vunpack.c.l.b16 %v799
          %v839 = vunpack.c.l.b16 %v800
          %v840 = vunpack.c.l.b16 %v801
          %v841 = vunpack.c.l.b16 %v802
          %v842 = vunpack.c.l.b16 %v803
          %v843 = vunpack.c.l.b16 %v804
          %v844 = vunpack.c.l.b16 %v805
          %v845 = vunpack.c.l.b16 %v806
          %v846 = vunpack.c.l.b16 %v807
          %v847 = vunpack.c.l.b16 %v808
          %v848 = vunpack.c.l.b16 %v809
          %v849 = vunpack.c.l.b16 %v810
          %v850 = vunpack.c.l.b16 %v811
          %v851 = vunpack.c.l.b16 %v812
          %v852 = vpack.c.b16 %v837, %v836
          %v853 = vpack.c.b16 %v839, %v838
          %v854 = vpack.c.b16 %v841, %v840
          %v855 = vpack.c.b16 %v843, %v842
          %v856 = vpack.c.b16 %v845, %v844
          %v857 = vpack.c.b16 %v847, %v846
          %v858 = vpack.c.b16 %v849, %v848
          %v859 = vpack.c.b16 %v851, %v850
          %868 = vmatprep.subr.bf16.mxu0 0
          %869 = vmatpush1.bf16.msra.mxu0 %v852
          %870 = vmatprep.subr.bf16.mxu0 0
          %871 = vmatpush1.bf16.msra.mxu0 %v853
          %872 = vmatprep.subr.bf16.mxu0 0
          %873 = vmatpush1.bf16.msra.mxu0 %v854
          %874 = vmatprep.subr.bf16.mxu0 0
          %875 = vmatpush1.bf16.msra.mxu0 %v855
          %876 = vmatprep.subr.bf16.mxu0 0
          %877 = vmatpush1.bf16.msra.mxu0 %v856
          %878 = vmatprep.subr.bf16.mxu0 0
          %879 = vmatpush1.bf16.msra.mxu0 %v857
          %880 = vmatprep.subr.bf16.mxu0 0
          %881 = vmatpush1.bf16.msra.mxu0 %v858
          %882 = vmatprep.subr.bf16.mxu0 0
          %883 = vmatpush1.bf16.msra.mxu0 %v859
          %884 = vmatprep.subr.bf16.mxu0 0
          %885 = vmatpush1.bf16.msra.mxu0 0
          %886 = vmatprep.subr.bf16.mxu0 0
          %887 = vmatpush1.bf16.msra.mxu0 0
          %888 = vmatprep.subr.bf16.mxu0 0
          %889 = vmatpush1.bf16.msra.mxu0 0
          %890 = vmatprep.subr.bf16.mxu0 0
          %891 = vmatpush1.bf16.msra.mxu0 0
          %892 = vmatprep.subr.bf16.mxu0 0
          %893 = vmatpush1.bf16.msra.mxu0 0
          %894 = vmatprep.subr.bf16.mxu0 0
          %895 = vmatpush1.bf16.msra.mxu0 0
          %896 = vmatprep.subr.bf16.mxu0 0
          %897 = vmatpush1.bf16.msra.mxu0 0
          %898 = vmatprep.subr.bf16.mxu0 0
          %899 = vmatpush1.bf16.msra.mxu0 0
          %900 = vmatprep.mubr.bf16.mxu0 0
          %901 = vmatmul.mubr.bf16.gmra.mrb[0].mxu0 %v685
          %v902 = vpop.f32.mrb[0].mxu0
          %v903 = vadd.f32 %v818, %v902
          %v904 = vpop.f32.mrb[0].mxu0
          %v905 = vpop.f32.mrb[0].mxu0
          %v906 = vpop.f32.mrb[0].mxu0
          %907 = vdwg.mxu0
          %v908 = vld [vmem:[#allocation7] sm:$0xff]
          %v909 = vmul.f32 %v903, 0.5
          %v910 = vmul.f32 %v909, 1.442695
          %v911 = vpow.pop %v910
          %v912 = vmul.f32 %v908, %v911
          %v913 = vadd.f32 %v912, %v792
          %v914 = vpack.c.bf16 %v913, %v913
          %v915 = vld [vmem:[#allocation13] sm:$0xf]
          %v916 = vld [vmem:[#allocation13 + $0x4] sm:$0xf]
          %v917 = vld [vmem:[#allocation13 + $0x8] sm:$0xf]
          %v918 = vld [vmem:[#allocation13 + $0xc] sm:$0xf]
          %v919 = vld [vmem:[#allocation13 + $0x10] sm:$0xf]
          %v920 = vld [vmem:[#allocation13 + $0x14] sm:$0xf]
          %v921 = vld [vmem:[#allocation13 + $0x18] sm:$0xf]
          %v922 = vld [vmem:[#allocation13 + $0x1c] sm:$0xf]
          %v923 = vld [vmem:[#allocation13 + $0x20] sm:$0xf]
          %v924 = vld [vmem:[#allocation13 + $0x24] sm:$0xf]
          %v925 = vld [vmem:[#allocation13 + $0x28] sm:$0xf]
          %v926 = vld [vmem:[#allocation13 + $0x2c] sm:$0xf]
          %v927 = vld [vmem:[#allocation13 + $0x30] sm:$0xf]
          %v928 = vld [vmem:[#allocation13 + $0x34] sm:$0xf]
          %v929 = vld [vmem:[#allocation13 + $0x38] sm:$0xf]
          %v930 = vld [vmem:[#allocation13 + $0x3c] sm:$0xf]
          %v931 = vld [vmem:[%s9] sm:$0x1]
          %v933 = vlaneseq
          %v934 = vshrl.u32 %v933, 7
          %v935 = vsub.s32 0, %v934
          %v936 = vrot.slane %v931, %v935
          %v954 = vunpack.c.l.b16 %v915
          %v955 = vunpack.c.l.b16 %v916
          %v956 = vunpack.c.l.b16 %v917
          %v957 = vunpack.c.l.b16 %v918
          %v958 = vunpack.c.l.b16 %v919
          %v959 = vunpack.c.l.b16 %v920
          %v960 = vunpack.c.l.b16 %v921
          %v961 = vunpack.c.l.b16 %v922
          %v962 = vunpack.c.l.b16 %v923
          %v963 = vunpack.c.l.b16 %v924
          %v964 = vunpack.c.l.b16 %v925
          %v965 = vunpack.c.l.b16 %v926
          %v966 = vunpack.c.l.b16 %v927
          %v967 = vunpack.c.l.b16 %v928
          %v968 = vunpack.c.l.b16 %v929
          %v969 = vunpack.c.l.b16 %v930
          %v970 = vpack.c.b16 %v955, %v954
          %v971 = vpack.c.b16 %v957, %v956
          %v972 = vpack.c.b16 %v959, %v958
          %v973 = vpack.c.b16 %v961, %v960
          %v974 = vpack.c.b16 %v963, %v962
          %v975 = vpack.c.b16 %v965, %v964
          %v976 = vpack.c.b16 %v967, %v966
          %v977 = vpack.c.b16 %v969, %v968
          %986 = vmatprep.subr.bf16.mxu0 0
          %987 = vmatpush1.bf16.msra.mxu0 %v970
          %988 = vmatprep.subr.bf16.mxu0 0
          %989 = vmatpush1.bf16.msra.mxu0 %v971
          %990 = vmatprep.subr.bf16.mxu0 0
          %991 = vmatpush1.bf16.msra.mxu0 %v972
          %992 = vmatprep.subr.bf16.mxu0 0
          %993 = vmatpush1.bf16.msra.mxu0 %v973
          %994 = vmatprep.subr.bf16.mxu0 0
          %995 = vmatpush1.bf16.msra.mxu0 %v974
          %996 = vmatprep.subr.bf16.mxu0 0
          %997 = vmatpush1.bf16.msra.mxu0 %v975
          %998 = vmatprep.subr.bf16.mxu0 0
          %999 = vmatpush1.bf16.msra.mxu0 %v976
          %1000 = vmatprep.subr.bf16.mxu0 0
          %1001 = vmatpush1.bf16.msra.mxu0 %v977
          %1002 = vmatprep.subr.bf16.mxu0 0
          %1003 = vmatpush1.bf16.msra.mxu0 0
          %1004 = vmatprep.subr.bf16.mxu0 0
          %1005 = vmatpush1.bf16.msra.mxu0 0
          %1006 = vmatprep.subr.bf16.mxu0 0
          %1007 = vmatpush1.bf16.msra.mxu0 0
          %1008 = vmatprep.subr.bf16.mxu0 0
          %1009 = vmatpush1.bf16.msra.mxu0 0
          %1010 = vmatprep.subr.bf16.mxu0 0
          %1011 = vmatpush1.bf16.msra.mxu0 0
          %1012 = vmatprep.subr.bf16.mxu0 0
          %1013 = vmatpush1.bf16.msra.mxu0 0
          %1014 = vmatprep.subr.bf16.mxu0 0
          %1015 = vmatpush1.bf16.msra.mxu0 0
          %1016 = vmatprep.subr.bf16.mxu0 0
          %1017 = vmatpush1.bf16.msra.mxu0 0
          %1018 = vmatprep.mubr.bf16.mxu0 0
          %1019 = vmatmul.mubr.bf16.gmra.mrb[0].mxu0 %v914
          %v1020 = vpop.f32.mrb[0].mxu0
          %v1021 = vadd.f32 %v936, %v1020
          %v1022 = vpop.f32.mrb[0].mxu0
          %v1023 = vpop.f32.mrb[0].mxu0
          %v1024 = vpop.f32.mrb[0].mxu0
          %1025 = vdwg.mxu0
          %v1026 = vtanh.pop %v1021
          %1027 = vst [vmem:[#allocation14] sm:$0xff] %v792
          %1028 = vst [vmem:[#allocation15] sm:$0xff] %v903
          %v1029 = vpack.c.bf16 %v1026, %v1026
          %1030 = vst [vmem:[#allocation17] sm:$0xf] %v1029
        $region92: #{tpu_custom_call.1} parent=59 // pred_fallthru
          _
        // Predicated region
        $region93: #{tpu_custom_call.1} parent=59 // pred_check
          %p1031 = pneg %p288
        $region94: #{tpu_custom_call.1} parent=59 // pred_check_branch
          %1033 = sbr.rel (%p1031) target = $region96
        $region95: #{tpu_custom_call.1} parent=59 // pred_region
          %s1035 = ssub.s32 128, 128
          %1036 = vsyncadd [#allocation6], %s1035
          %s1037 = smul.addr %s35, 128
          %s1038 = scalar_lea.hbm %s10, %s1037
          %s1040 = sshll.u32 [#allocation14], 4
          %s1041 = int_to_ptr.vmem [resolvable:$true] %s1040
          %1043 = dma.vmem_to_hbm [thread:$0]  %s1041, 128, %s1038, [#allocation6]
        $region96: #{tpu_custom_call.1} parent=59 // pred_fallthru
          _
        // Predicated region
        $region97: #{tpu_custom_call.1} parent=59 // pred_check
          %p1044 = pneg %p314
        $region98: #{tpu_custom_call.1} parent=59 // pred_check_branch
          %1046 = sbr.rel (%p1044) target = $region100
        $region99: #{tpu_custom_call.1} parent=59 // pred_region
          %s1048 = ssub.s32 128, 128
          %1049 = vsyncadd [#allocation16], %s1048
          %s1050 = smul.addr %s35, 128
          %s1051 = scalar_lea.hbm %s11, %s1050
          %s1053 = sshll.u32 [#allocation15], 4
          %s1054 = int_to_ptr.vmem [resolvable:$true] %s1053
          %1056 = dma.vmem_to_hbm [thread:$0]  %s1054, 128, %s1051, [#allocation16]
        $region100: #{tpu_custom_call.1} parent=59 // pred_fallthru
          _
        // Predicated region
        $region101: #{tpu_custom_call.1} parent=59 // pred_check
          %p1057 = pneg %p340
        $region102: #{tpu_custom_call.1} parent=59 // pred_check_branch
          %1059 = sbr.rel (%p1057) target = $region104
        $region103: #{tpu_custom_call.1} parent=59 // pred_region
          %s1061 = ssub.s32 64, 64
          %1062 = vsyncadd [#allocation16], %s1061
          %s1063 = smul.addr %s35, 64
          %s1064 = scalar_lea.hbm %s12, %s1063
          %s1066 = sshll.u32 [#allocation17], 4
          %s1067 = int_to_ptr.vmem [resolvable:$true] %s1066
          %1069 = dma.vmem_to_hbm [thread:$0]  %s1067, 64, %s1064, [#allocation16]
        $region104: #{tpu_custom_call.1} parent=59 // pred_fallthru
          _
        // Predicated region
        $region105: #{tpu_custom_call.1} parent=59 // pred_check
          %p1070 = pneg %p288
        $region106: #{tpu_custom_call.1} parent=59 // pred_check_branch
          %1072 = sbr.rel (%p1070) target = $region108
        $region107: #{tpu_custom_call.1} parent=59 // pred_region
          %1073 = dma.done [#allocation6], 128
        $region108: #{tpu_custom_call.1} parent=59 // pred_fallthru
          _
        // Predicated region
        $region109: #{tpu_custom_call.1} parent=59 // pred_check
          %p1074 = pneg %p314
        $region110: #{tpu_custom_call.1} parent=59 // pred_check_branch
          %1076 = sbr.rel (%p1074) target = $region112
        $region111: #{tpu_custom_call.1} parent=59 // pred_region
          %1077 = dma.done [#allocation16], 128
        $region112: #{tpu_custom_call.1} parent=59 // pred_fallthru
          _
        // Predicated region
        $region113: #{tpu_custom_call.1} parent=59 // pred_check
          %p1078 = pneg %p340
        $region114: #{tpu_custom_call.1} parent=59 // pred_check_branch
          %1080 = sbr.rel (%p1078) target = $region116
        $region115: #{tpu_custom_call.1} parent=59 // pred_region
          %1081 = dma.done [#allocation16], 64
        $region116: #{tpu_custom_call.1} parent=59 // pred_fallthru
          _
      $region60: #{tpu_custom_call.1} parent=5 // pred_fallthru
        _
      %p1082 = scmp.le.s32.totalorder 2, %s26
      // Predicated region
      $region117: #{tpu_custom_call.1} parent=5 // pred_check
        %p1083 = pneg %p1082
      $region118: #{tpu_custom_call.1} parent=5 // pred_check_branch
        %1085 = sbr.rel (%p1083) target = $region120
      $region119: #{tpu_custom_call.1} parent=5 // pred_region
        %s1086 = ssub.s32 %s26, 2
      $region120: #{tpu_custom_call.1} parent=5 // pred_fallthru
        _
    $region6: #{tpu_custom_call.1} parent=1 // loop_footer
      %s30 = sadd.s32 1, %s26
    $region7: #{tpu_custom_call.1} parent=1 // loop_footer_branch
      %25 = sbr.rel target = $region3
    $region8: #{tpu_custom_call.1} parent=1 // loop_exit
      _
    %1087 = vsyncpa [#allocation5], 1
    %s1088 = scalar_lea.sflag [#allocation5], 1
    %1089 = vsyncpa %s1088, 1
    %1090 = vsyncpa [#allocation8], 1
    %1091 = vsyncpa [#allocation12], 1
    %1092 = vsyncpa [#allocation6], 1
    %s1093 = scalar_lea.sflag [#allocation6], 1
    %1094 = vsyncpa %s1093, 1
    %1095 = vsyncpa [#allocation16], 1

</llo_original>
